<compile_context>
chip_gen: v7x
topology: tpu7x:2x2x1
jax: 0.10.0
libtpu: 0.0.40
codegen_flags: <defaults>
</compile_context>

<pallas_src>
import jax
import jax.numpy as jnp
from jax.experimental import pallas as pl
from jax.experimental.pallas import tpu as pltpu


def _h_sigmoid_kernel(x_ref, o_ref):
    x = x_ref[...]
    # relu6(x + 3) / 6 == clip(x + 3, 0, 6) * (1/6).  Weak-typed literals keep
    # bf16 inputs on the bf16 VPU (no widening).  The reciprocal-multiply is
    # within 1 ulp of a true divide — negligible for hard-sigmoid.
    y = jnp.minimum(jnp.maximum(x + 3.0, 0.0), 6.0) * (1.0 / 6.0)
    o_ref[...] = y.astype(o_ref.dtype)


def _cdiv(a, b):
    return -(-a // b)


def _round_down(v, m):
    return (v // m) * m


def _round_up(v, m):
    return _cdiv(v, m) * m


def _choose_blocking(rows, cols, itemsize, sub, target_block_bytes,
                     min_block_bytes, min_grid):
    """Pick (block_rows, grid_len) for a (rows, cols) slab."""
    row_bytes = cols * itemsize
    if rows <= sub:
        # Trivially small input: one full-dim block (legal even if rows % 8 != 0).
        return rows, 1

    ideal_rows = max(sub, _round_down(target_block_bytes // row_bytes, sub))
    if _cdiv(rows, ideal_rows) >= min_grid:
        # Big tensor: target-size blocks already give plenty of grid steps.
        block_rows = ideal_rows
    else:
        # Mid-size tensor: split roughly evenly into up to `min_grid` blocks so
        # both v7x TensorCores get balanced work, but never shrink blocks below
        # ~min_block_bytes (per-grid-step overhead), and always use >= 2 blocks.
        min_rows = max(sub, _round_down(min_block_bytes // row_bytes, sub))
        g = min(min_grid, max(2, rows // min_rows))
        block_rows = max(sub, _round_up(_cdiv(rows, g), sub))
        if block_rows >= rows:  # safety: guarantee at least 2 blocks
            block_rows = max(sub, _round_down(rows - 1, sub))

    return block_rows, _cdiv(rows, block_rows)


def _h_sigmoid_2d(x2d, target_block_bytes):
    """Run the kernel over a (rows, cols) slab with cols a multiple of 128."""
    rows, cols = x2d.shape
    dtype = x2d.dtype
    itemsize = jnp.dtype(dtype).itemsize
    sub = 8 * max(1, 4 // itemsize)  # sublane multiple: 8 f32, 16 bf16/f16

    block_rows, grid_len = _choose_blocking(
        rows, cols, itemsize, sub, target_block_bytes,
        min_block_bytes=512 << 10, min_grid=8)

    in_spec_kwargs = {}
    if grid_len >= 2:
        # 3-deep input pipeline smooths DMA start-up / per-step gaps.
        # VMEM: 3 in + 2 out buffers <= 5 * 4 MiB = 20 MiB, well under the limit.
        in_spec_kwargs["pipeline_mode"] = pl.Buffered(3)

    n = rows * cols
    return pl.pallas_call(
        _h_sigmoid_kernel,
        out_shape=jax.ShapeDtypeStruct((rows, cols), dtype),
        grid_spec=pltpu.PrefetchScalarGridSpec(
            num_scalar_prefetch=0,
            grid=(grid_len,),
            in_specs=[pl.BlockSpec((block_rows, cols), lambda i: (i, 0),
                                   **in_spec_kwargs)],
            out_specs=pl.BlockSpec((block_rows, cols), lambda i: (i, 0)),
        ),
        compiler_params=pltpu.CompilerParams(
            dimension_semantics=("parallel",),
            vmem_limit_bytes=48 << 20,
        ),
        cost_estimate=pl.CostEstimate(
            flops=4 * n,
            transcendentals=0,
            bytes_accessed=2 * n * itemsize,
        ),
    )(x2d)


def h_sigmoid(x, *, target_block_bytes=4 << 20):
    """Elementwise hard-sigmoid on an arbitrary-shaped float array (NCHW expected)."""
    orig_shape = x.shape
    dtype = x.dtype
    if not jnp.issubdtype(dtype, jnp.floating):
        raise TypeError("h_sigmoid supports floating-point inputs only "
                        "(matches PyTorch F.relu6/hardsigmoid semantics).")
    n = x.size
    if n == 0:
        return x

    # Pick a lane-dense width (multiple of 128, >= 512 preferred) that divides
    # n exactly, so the reshape to 2-D is a free bitcast — no copies.
    cols = None
    for c in (4096, 2048, 1024, 512, 256, 128):
        if n % c == 0:
            cols = c
            break

    if cols is None:
        # Ragged size: push the 512-aligned bulk through the kernel, fix the
        # (<512-element) tail with plain jnp.  Avoids full-array pad + slice.
        tail_cols = 512
        n_bulk = (n // tail_cols) * tail_cols
        x_flat = x.reshape(-1)
        tail = x_flat[n_bulk:]
        tail_out = (jnp.minimum(jnp.maximum(tail + 3.0, 0.0), 6.0)
                    * (1.0 / 6.0)).astype(dtype)
        if n_bulk == 0:
            return tail_out.reshape(orig_shape)
        bulk_out = _h_sigmoid_2d(
            x_flat[:n_bulk].reshape(n_bulk // tail_cols, tail_cols),
            target_block_bytes)
        return jnp.concatenate([bulk_out.reshape(-1), tail_out]).reshape(orig_shape)

    rows = n // cols
    out2d = _h_sigmoid_2d(x.reshape(rows, cols), target_block_bytes)
    return out2d.reshape(orig_shape)
    # Note: input_output_aliases={0: 0} would shave HBM footprint when the
    # caller donates the input; omitted here since nothing is donated.


def h_sigmoid_ref(x):
    return jnp.clip(x + 3.0, 0.0, 6.0) / 6.0


if __name__ == "__main__":
    key = jax.random.PRNGKey(0)
    k1, k2, k3, k4, k5 = jax.random.split(key, 5)

    # 1) Basic NCHW case (batch=2, channels=4, 16x16): single full block.
    x = jax.random.normal(k1, (2, 4, 16, 16), dtype=jnp.float32) * 4.0
    y = jax.block_until_ready(h_sigmoid(x))
    assert y.shape == x.shape and y.dtype == x.dtype
    assert jnp.allclose(y, h_sigmoid_ref(x), atol=1e-6, rtol=1e-6)

    # 2) Multi-block path with a clipped partial last block (rows=49, grid=2),
    #    exercising Buffered(3) + parallel grid — no pad/slice copies.
    x2 = jax.random.normal(k2, (2, 32, 28, 28), dtype=jnp.float32) * 4.0
    y2 = jax.block_until_ready(h_sigmoid(x2))
    assert y2.shape == x2.shape and y2.dtype == x2.dtype
    assert jnp.allclose(y2, h_sigmoid_ref(x2), atol=1e-6, rtol=1e-6)

    # 3) bf16 path (sublane multiple 16), arithmetic stays in bf16.
    x3 = (jax.random.normal(k3, (2, 4, 16, 16), dtype=jnp.float32) * 4.0
          ).astype(jnp.bfloat16)
    y3 = jax.block_until_ready(h_sigmoid(x3))
    assert y3.shape == x3.shape and y3.dtype == jnp.bfloat16
    assert jnp.allclose(y3.astype(jnp.float32),
                        h_sigmoid_ref(x3.astype(jnp.float32)),
                        atol=5e-2, rtol=0.0)

    # 4) Ragged tiny size (n % 128 != 0): pure-jnp tail path.
    x4 = jax.random.normal(k4, (2, 3, 7, 5), dtype=jnp.float32) * 4.0
    y4 = jax.block_until_ready(h_sigmoid(x4))
    assert y4.shape == x4.shape and y4.dtype == x4.dtype
    assert jnp.allclose(y4, h_sigmoid_ref(x4), atol=1e-6, rtol=1e-6)

    # 5) Ragged size with a non-empty bulk: kernel on bulk + jnp tail + concat.
    x5 = jax.random.normal(k5, (2, 5, 13, 13), dtype=jnp.float32) * 4.0
    y5 = jax.block_until_ready(h_sigmoid(x5))
    assert y5.shape == x5.shape and y5.dtype == x5.dtype
    assert jnp.allclose(y5, h_sigmoid_ref(x5), atol=1e-6, rtol=1e-6)

    print("KERNEL_OK")
</pallas_src>

<mosaic_0001>
module attributes {stable_mosaic.version = 11 : i64} {
  func.func @_h_sigmoid_kernel(%arg0: i32, %arg1: memref<1x2048xf32, #tpu.memory_space<vmem>>, %arg2: memref<1x2048xf32, #tpu.memory_space<vmem>>) attributes {dimension_semantics = [#tpu.dimension_semantics<parallel>], iteration_bounds = array<i64: 1>, scalar_prefetch = 0 : i64, scratch_operands = 0 : i64, tpu.core_type = #tpu.core_type<tc>, window_params = [{transform_indices = @transform_0, window_bounds = array<i64: 1, 2048>}, {transform_indices = @transform_1, window_bounds = array<i64: 1, 2048>}]} {
    %c0 = arith.constant 0 : index
    %c0_0 = arith.constant 0 : index
    %0 = vector.load %arg1[%c0, %c0_0] : memref<1x2048xf32, #tpu.memory_space<vmem>>, vector<1x2048xf32>
    %cst = arith.constant 3.000000e+00 : f32
    %1 = vector.broadcast %cst : f32 to vector<1x2048xf32>
    %2 = arith.addf %0, %1 : vector<1x2048xf32>
    %cst_1 = arith.constant 0.000000e+00 : f32
    %3 = vector.broadcast %cst_1 : f32 to vector<1x2048xf32>
    %4 = arith.maximumf %2, %3 : vector<1x2048xf32>
    %cst_2 = arith.constant 6.000000e+00 : f32
    %5 = vector.broadcast %cst_2 : f32 to vector<1x2048xf32>
    %6 = arith.minimumf %4, %5 : vector<1x2048xf32>
    %cst_3 = arith.constant 0.166666672 : f32
    %7 = vector.broadcast %cst_3 : f32 to vector<1x2048xf32>
    %8 = arith.mulf %6, %7 : vector<1x2048xf32>
    %c0_4 = arith.constant 0 : index
    %c0_5 = arith.constant 0 : index
    %9 = vector.load %arg2[%c0_4, %c0_5] : memref<1x2048xf32, #tpu.memory_space<vmem>>, vector<1x2048xf32>
    tpu.vector_store %arg2[%c0_4, %c0_5], %8 {strides = array<i32>} : memref<1x2048xf32, #tpu.memory_space<vmem>>, vector<1x2048xf32>,
    return
  }
  func.func @transform_0(%arg0: i32) -> (i32, i32) {
    %c0_i32 = arith.constant 0 : i32
    %c0_i32_0 = arith.constant 0 : i32
    return %arg0, %c0_i32 : i32, i32
  }
  func.func @transform_1(%arg0: i32) -> (i32, i32) {
    %c0_i32 = arith.constant 0 : i32
    %c0_i32_0 = arith.constant 0 : i32
    return %arg0, %c0_i32 : i32, i32
  }
}

</mosaic_0001>

<llo_original>
// kernel: tpu_custom_call.1
$region0: #{tpu_custom_call.1}
  #allocation0 [shape = 'u32[]', space=smem, size = 0x4, offset = 0x4, fixed_abs, tag = 'smem constant byte address 0x4 - core index']
  #allocation1 [shape = 'u32[144,128]{1,0:T(1,128)}', space=vmem, size = 0x12000, scoped, tag = 'internal scratch']
  %s0 = inlined_call_operand.hbm [shape: f32[1,2048], index: 0, kind: input, shape index: {}]
  %s1 = inlined_call_operand.hbm [shape: f32[1,2048], index: 1, kind: output, shape index: {}]
  %s2 = sld [smem:[#allocation0]]
  $region18: #{tpu_custom_call.1} parent=0
    _
  %s4 = ssub.s32 1, %s2
  %s5 = scalar_select 0, %s4, %s2
  $region1: #{tpu_custom_call.1} parent=0
    #allocation2 [shape = 'u8[8192]{0}', space=vmem, size = 0x2000, scoped, tag = 'input window, operand 0, single buffered']
    #allocation3 [shape = 's32[1]{0}', space=sflag, size = 0x4, scoped, tag = 'scoped memory for tpu_custom_call.1']
    #allocation4 [shape = 's32[1]{0}', space=sflag, size = 0x4, scoped, tag = 'scoped memory for tpu_custom_call.1']
    #allocation5 [shape = 'u8[8192]{0}', space=vmem, size = 0x2000, scoped, tag = 'output window, operand 0, single buffered']
    %6 = vsyncpa [#allocation3], 0
    %7 = vsyncpa [#allocation4], 0
    // Predicated region
    $region2: #{tpu_custom_call.1} parent=1 // pred_check
      _
    $region3: #{tpu_custom_call.1} parent=1 // pred_check_branch
      %9 = sbr.rel (0) target = $region5
    $region4: #{tpu_custom_call.1} parent=1 // pred_region
      %s11 = ssub.s32 256, 256
      %12 = vsyncadd [#allocation3], %s11
      %s14 = sshll.u32 [#allocation2], 4
      %s15 = int_to_ptr.vmem [resolvable:$true] %s14
      %17 = dma.hbm_to_vmem [thread:$0]  %s0, 256, %s15, [#allocation3]
    $region5: #{tpu_custom_call.1} parent=1 // pred_fallthru
      _
    // Predicated region
    $region6: #{tpu_custom_call.1} parent=1 // pred_check
      _
    $region7: #{tpu_custom_call.1} parent=1 // pred_check_branch
      %19 = sbr.rel (0) target = $region9
    $region8: #{tpu_custom_call.1} parent=1 // pred_region
      %20 = dma.done [#allocation3], 256
    $region9: #{tpu_custom_call.1} parent=1 // pred_fallthru
      _
    %v21 = vld [vmem:[#allocation2] sm:$0xff]
    %v22 = vld [vmem:[#allocation2 + $0x8] sm:$0xff]
    %v23 = vadd.f32 %v21, 3.0
    %v24 = vadd.f32 %v22, 3.0
    %v25 = vmax.f32 %v23, 0.0
    %v26 = vmax.f32 %v24, 0.0
    %v27 = vmin.f32 %v25, 6.0
    %v28 = vmin.f32 %v26, 6.0
    %v29 = vmul.f32 %v27, 0.16666667
    %v30 = vmul.f32 %v28, 0.16666667
    %31 = vst [vmem:[#allocation5] sm:$0xff] %v29
    %32 = vst [vmem:[#allocation5 + $0x8] sm:$0xff] %v30
    // Predicated region
    $region10: #{tpu_custom_call.1} parent=1 // pred_check
      _
    $region11: #{tpu_custom_call.1} parent=1 // pred_check_branch
      %34 = sbr.rel (0) target = $region13
    $region12: #{tpu_custom_call.1} parent=1 // pred_region
      %s36 = ssub.s32 256, 256
      %37 = vsyncadd [#allocation4], %s36
      %s39 = sshll.u32 [#allocation5], 4
      %s40 = int_to_ptr.vmem [resolvable:$true] %s39
      %42 = dma.vmem_to_hbm [thread:$0]  %s40, 256, %s1, [#allocation4]
    $region13: #{tpu_custom_call.1} parent=1 // pred_fallthru
      _
    // Predicated region
    $region14: #{tpu_custom_call.1} parent=1 // pred_check
      _
    $region15: #{tpu_custom_call.1} parent=1 // pred_check_branch
      %44 = sbr.rel (0) target = $region17
    $region16: #{tpu_custom_call.1} parent=1 // pred_region
      %45 = dma.done [#allocation4], 256
    $region17: #{tpu_custom_call.1} parent=1 // pred_fallthru
      _
    %46 = vsyncpa [#allocation3], 1
    %47 = vsyncpa [#allocation4], 1

</llo_original>
